<compile_context>
chip_gen: v7x
topology: tpu7x:2x2x1
jax: 0.10.0
libtpu: 0.0.40
codegen_flags: <defaults>
</compile_context>

<pallas_src>
import jax
import jax.numpy as jnp
from jax.experimental import pallas as pl
from jax.experimental.pallas import tpu as pltpu


def policy_net_kernel(x_ref, w1_ref, b1_ref, w2_ref, b2_ref, w3_ref, b3_ref, o_ref):
    # MXU matmuls take bf16 operands with f32 accumulation; elementwise math in f32.
    x = x_ref[...].astype(jnp.bfloat16)

    h1 = jnp.dot(x, w1_ref[...], preferred_element_type=jnp.float32) + b1_ref[...]
    h1 = jnp.maximum(h1, 0.0)                                    # ReLU (VPU)

    h2 = jnp.dot(h1.astype(jnp.bfloat16), w2_ref[...],
                 preferred_element_type=jnp.float32) + b2_ref[...]
    h2 = jnp.maximum(h2, 0.0)                                    # ReLU (VPU)

    z = jnp.dot(h2.astype(jnp.bfloat16), w3_ref[...],
                preferred_element_type=jnp.float32) + b3_ref[...]

    # -2 + 4*sigmoid(z) == 2*tanh(z/2): single EUP transcendental epilogue.
    o_ref[...] = 2.0 * jnp.tanh(0.5 * z)


def policy_net_forward(x, params, *, block_b=256):
    """x: [B, ndim_states] float32. params: dict of w1,b1,w2,b2,w3,b3 (f32)."""
    w1 = params["w1"].astype(jnp.bfloat16)
    w2 = params["w2"].astype(jnp.bfloat16)
    w3 = params["w3"].astype(jnp.bfloat16)
    b1, b2, b3 = params["b1"], params["b2"], params["b3"]

    B, ndim_states = x.shape
    h1d = w1.shape[1]
    h2d = w2.shape[1]
    ndim_actions = w3.shape[1]

    # Batch tile: multiple of 8 sublanes, capped at block_b. Pad B up so the
    # grid divides evenly (padded rows are computed then sliced off).
    tb = min(block_b, B)
    tb = max(8, ((tb + 7) // 8) * 8)
    n_blocks = pl.cdiv(B, tb)
    b_pad = n_blocks * tb
    if b_pad != B:
        x = jnp.pad(x, ((0, b_pad - B), (0, 0)))

    # Per-step VMEM footprint estimate (double-buffered x/out tiles, resident
    # bf16 weights, f32 biases, f32 intermediates) with generous headroom.
    f32b, bf16b = 4, 2
    vmem_bytes = (
        2 * tb * ndim_states * f32b
        + 2 * tb * ndim_actions * f32b
        + (ndim_states * h1d + h1d * h2d + h2d * ndim_actions) * bf16b
        + (h1d + h2d + ndim_actions) * f32b
        + tb * (h1d + h2d) * f32b
    )
    vmem_limit = min(max(2 * vmem_bytes, 16 << 20), 48 << 20)

    out = pl.pallas_call(
        policy_net_kernel,
        out_shape=jax.ShapeDtypeStruct((b_pad, ndim_actions), jnp.float32),
        grid=(n_blocks,),
        in_specs=[
            pl.BlockSpec((tb, ndim_states), lambda i: (i, 0)),   # x: batch-tiled
            pl.BlockSpec((ndim_states, h1d), lambda i: (0, 0)),  # weights/biases
            pl.BlockSpec((1, h1d), lambda i: (0, 0)),            # stay resident
            pl.BlockSpec((h1d, h2d), lambda i: (0, 0)),
            pl.BlockSpec((1, h2d), lambda i: (0, 0)),
            pl.BlockSpec((h2d, ndim_actions), lambda i: (0, 0)),
            pl.BlockSpec((1, ndim_actions), lambda i: (0, 0)),
        ],
        out_specs=pl.BlockSpec((tb, ndim_actions), lambda i: (i, 0)),
        compiler_params=pltpu.CompilerParams(
            dimension_semantics=("parallel",),   # shard batch across TCs (v7x)
            vmem_limit_bytes=vmem_limit,
        ),
    )(x, w1, b1, w2, b2, w3, b3)

    return out[:B] if b_pad != B else out


def init_params(key, ndim_states, ndim_actions):
    """Deterministic init mimicking nn.Linear's default U(-1/sqrt(fan_in), +)."""
    dims = [
        (ndim_states, 10 * ndim_states),
        (10 * ndim_states, 5 * ndim_states),
        (5 * ndim_states, ndim_actions),
    ]
    params = {}
    for i, (fan_in, fan_out) in enumerate(dims, start=1):
        key, kw, kb = jax.random.split(key, 3)
        bound = 1.0 / jnp.sqrt(fan_in)
        params[f"w{i}"] = jax.random.uniform(
            kw, (fan_in, fan_out), jnp.float32, -bound, bound)
        params[f"b{i}"] = jax.random.uniform(
            kb, (1, fan_out), jnp.float32, -bound, bound)
    return params


def reference_forward_bf16(x, params):
    """Pure-JAX reference mirroring the kernel's bf16-operand/f32-accum numerics."""
    w1 = params["w1"].astype(jnp.bfloat16)
    w2 = params["w2"].astype(jnp.bfloat16)
    w3 = params["w3"].astype(jnp.bfloat16)
    h1 = jnp.maximum(jnp.dot(x.astype(jnp.bfloat16), w1,
                             preferred_element_type=jnp.float32) + params["b1"], 0.0)
    h2 = jnp.maximum(jnp.dot(h1.astype(jnp.bfloat16), w2,
                             preferred_element_type=jnp.float32) + params["b2"], 0.0)
    z = jnp.dot(h2.astype(jnp.bfloat16), w3,
                preferred_element_type=jnp.float32) + params["b3"]
    return -2.0 + 4.0 * jax.nn.sigmoid(z)


def reference_forward_f32(x, params):
    h1 = jnp.maximum(x @ params["w1"] + params["b1"], 0.0)
    h2 = jnp.maximum(h1 @ params["w2"] + params["b2"], 0.0)
    return -2.0 + 4.0 * jax.nn.sigmoid(h2 @ params["w3"] + params["b3"])


if __name__ == "__main__":
    ndim_states = 16      # -> hidden dims 160 and 80
    ndim_actions = 8
    batch = 512           # small, but enough to exercise the batch grid

    key = jax.random.PRNGKey(0)
    key, kx = jax.random.split(key)
    params = init_params(key, ndim_states, ndim_actions)
    x = jax.random.normal(kx, (batch, ndim_states), jnp.float32)

    out = policy_net_forward(x, params, block_b=128)   # grid of 4 batch tiles
    out = jax.block_until_ready(out)

    ref_bf16 = reference_forward_bf16(x, params)
    ref_f32 = reference_forward_f32(x, params)

    assert out.shape == (batch, ndim_actions)
    assert jnp.allclose(out, ref_bf16, atol=2e-3, rtol=2e-3), "mismatch vs bf16 reference"
    assert jnp.allclose(out, ref_f32, atol=5e-2, rtol=5e-2), "mismatch vs f32 reference"
    assert bool(jnp.all(out >= -2.0) & jnp.all(out <= 2.0))

    print("KERNEL_OK")
</pallas_src>

<mosaic_0001>
module attributes {stable_mosaic.version = 11 : i64} {
  func.func @policy_net_kernel(%arg0: i32, %arg1: memref<128x16xf32, #tpu.memory_space<vmem>>, %arg2: memref<16x160xbf16, #tpu.memory_space<vmem>>, %arg3: memref<1x160xf32, #tpu.memory_space<vmem>>, %arg4: memref<160x80xbf16, #tpu.memory_space<vmem>>, %arg5: memref<1x80xf32, #tpu.memory_space<vmem>>, %arg6: memref<80x8xbf16, #tpu.memory_space<vmem>>, %arg7: memref<1x8xf32, #tpu.memory_space<vmem>>, %arg8: memref<128x8xf32, #tpu.memory_space<vmem>>) attributes {dimension_semantics = [#tpu.dimension_semantics<parallel>], iteration_bounds = array<i64: 4>, scalar_prefetch = 0 : i64, scratch_operands = 0 : i64, tpu.core_type = #tpu.core_type<tc>, window_params = [{transform_indices = @transform_0, window_bounds = array<i64: 128, 16>}, {pipeline_mode = #tpu.pipeline_mode<synchronous>, transform_indices = @transform_1, window_bounds = array<i64: 16, 160>}, {pipeline_mode = #tpu.pipeline_mode<synchronous>, transform_indices = @transform_2, window_bounds = array<i64: 1, 160>}, {pipeline_mode = #tpu.pipeline_mode<synchronous>, transform_indices = @transform_3, window_bounds = array<i64: 160, 80>}, {pipeline_mode = #tpu.pipeline_mode<synchronous>, transform_indices = @transform_4, window_bounds = array<i64: 1, 80>}, {pipeline_mode = #tpu.pipeline_mode<synchronous>, transform_indices = @transform_5, window_bounds = array<i64: 80, 8>}, {pipeline_mode = #tpu.pipeline_mode<synchronous>, transform_indices = @transform_6, window_bounds = array<i64: 1, 8>}, {transform_indices = @transform_7, window_bounds = array<i64: 128, 8>}]} {
    %c0 = arith.constant 0 : index
    %c0_0 = arith.constant 0 : index
    %0 = vector.load %arg1[%c0, %c0_0] : memref<128x16xf32, #tpu.memory_space<vmem>>, vector<128x16xf32>
    %1 = arith.truncf %0 : vector<128x16xf32> to vector<128x16xbf16>
    %c0_1 = arith.constant 0 : index
    %c0_2 = arith.constant 0 : index
    %2 = vector.load %arg2[%c0_1, %c0_2] : memref<16x160xbf16, #tpu.memory_space<vmem>>, vector<16x160xbf16>
    %cst = arith.constant dense<0.000000e+00> : vector<128x160xf32>
    %3 = tpu.matmul %1, %2, %cst {dimension_numbers = #tpu.dot_dimension_numbers<[1], [0], [0], [1], [0, 0, 1, 1], [], []>} : vector<128x16xbf16>, vector<16x160xbf16>, vector<128x160xf32> -> vector<128x160xf32>
    %c0_3 = arith.constant 0 : index
    %c0_4 = arith.constant 0 : index
    %4 = vector.load %arg3[%c0_3, %c0_4] : memref<1x160xf32, #tpu.memory_space<vmem>>, vector<1x160xf32>
    %5 = vector.broadcast %4 : vector<1x160xf32> to vector<128x160xf32>
    %6 = arith.addf %3, %5 : vector<128x160xf32>
    %cst_5 = arith.constant 0.000000e+00 : f32
    %7 = vector.broadcast %cst_5 : f32 to vector<128x160xf32>
    %8 = arith.maximumf %6, %7 : vector<128x160xf32>
    %9 = arith.truncf %8 : vector<128x160xf32> to vector<128x160xbf16>
    %c0_6 = arith.constant 0 : index
    %c0_7 = arith.constant 0 : index
    %10 = vector.load %arg4[%c0_6, %c0_7] : memref<160x80xbf16, #tpu.memory_space<vmem>>, vector<160x80xbf16>
    %cst_8 = arith.constant dense<0.000000e+00> : vector<128x80xf32>
    %11 = tpu.matmul %9, %10, %cst_8 {dimension_numbers = #tpu.dot_dimension_numbers<[1], [0], [0], [1], [0, 0, 1, 1], [], []>} : vector<128x160xbf16>, vector<160x80xbf16>, vector<128x80xf32> -> vector<128x80xf32>
    %c0_9 = arith.constant 0 : index
    %c0_10 = arith.constant 0 : index
    %12 = vector.load %arg5[%c0_9, %c0_10] : memref<1x80xf32, #tpu.memory_space<vmem>>, vector<1x80xf32>
    %13 = vector.broadcast %12 : vector<1x80xf32> to vector<128x80xf32>
    %14 = arith.addf %11, %13 : vector<128x80xf32>
    %cst_11 = arith.constant 0.000000e+00 : f32
    %15 = vector.broadcast %cst_11 : f32 to vector<128x80xf32>
    %16 = arith.maximumf %14, %15 : vector<128x80xf32>
    %17 = arith.truncf %16 : vector<128x80xf32> to vector<128x80xbf16>
    %c0_12 = arith.constant 0 : index
    %c0_13 = arith.constant 0 : index
    %18 = vector.load %arg6[%c0_12, %c0_13] : memref<80x8xbf16, #tpu.memory_space<vmem>>, vector<80x8xbf16>
    %cst_14 = arith.constant dense<0.000000e+00> : vector<128x8xf32>
    %19 = tpu.matmul %17, %18, %cst_14 {dimension_numbers = #tpu.dot_dimension_numbers<[1], [0], [0], [1], [0, 0, 1, 1], [], []>} : vector<128x80xbf16>, vector<80x8xbf16>, vector<128x8xf32> -> vector<128x8xf32>
    %c0_15 = arith.constant 0 : index
    %c0_16 = arith.constant 0 : index
    %20 = vector.load %arg7[%c0_15, %c0_16] : memref<1x8xf32, #tpu.memory_space<vmem>>, vector<1x8xf32>
    %21 = vector.broadcast %20 : vector<1x8xf32> to vector<128x8xf32>
    %22 = arith.addf %19, %21 : vector<128x8xf32>
    %cst_17 = arith.constant 5.000000e-01 : f32
    %23 = vector.broadcast %cst_17 : f32 to vector<128x8xf32>
    %24 = arith.mulf %23, %22 : vector<128x8xf32>
    %25 = math.tanh %24 : vector<128x8xf32>
    %cst_18 = arith.constant 2.000000e+00 : f32
    %26 = vector.broadcast %cst_18 : f32 to vector<128x8xf32>
    %27 = arith.mulf %26, %25 : vector<128x8xf32>
    %c0_19 = arith.constant 0 : index
    %c0_20 = arith.constant 0 : index
    %28 = vector.load %arg8[%c0_19, %c0_20] : memref<128x8xf32, #tpu.memory_space<vmem>>, vector<128x8xf32>
    tpu.vector_store %arg8[%c0_19, %c0_20], %27 {strides = array<i32>} : memref<128x8xf32, #tpu.memory_space<vmem>>, vector<128x8xf32>,
    return
  }
  func.func @transform_0(%arg0: i32) -> (i32, i32) {
    %c0_i32 = arith.constant 0 : i32
    %c0_i32_0 = arith.constant 0 : i32
    return %arg0, %c0_i32 : i32, i32
  }
  func.func @transform_1(%arg0: i32) -> (i32, i32) {
    %c0_i32 = arith.constant 0 : i32
    %c0_i32_0 = arith.constant 0 : i32
    %c0_i32_1 = arith.constant 0 : i32
    return %c0_i32, %c0_i32_0 : i32, i32
  }
  func.func @transform_2(%arg0: i32) -> (i32, i32) {
    %c0_i32 = arith.constant 0 : i32
    %c0_i32_0 = arith.constant 0 : i32
    %c0_i32_1 = arith.constant 0 : i32
    return %c0_i32, %c0_i32_0 : i32, i32
  }
  func.func @transform_3(%arg0: i32) -> (i32, i32) {
    %c0_i32 = arith.constant 0 : i32
    %c0_i32_0 = arith.constant 0 : i32
    %c0_i32_1 = arith.constant 0 : i32
    return %c0_i32, %c0_i32_0 : i32, i32
  }
  func.func @transform_4(%arg0: i32) -> (i32, i32) {
    %c0_i32 = arith.constant 0 : i32
    %c0_i32_0 = arith.constant 0 : i32
    %c0_i32_1 = arith.constant 0 : i32
    return %c0_i32, %c0_i32_0 : i32, i32
  }
  func.func @transform_5(%arg0: i32) -> (i32, i32) {
    %c0_i32 = arith.constant 0 : i32
    %c0_i32_0 = arith.constant 0 : i32
    %c0_i32_1 = arith.constant 0 : i32
    return %c0_i32, %c0_i32_0 : i32, i32
  }
  func.func @transform_6(%arg0: i32) -> (i32, i32) {
    %c0_i32 = arith.constant 0 : i32
    %c0_i32_0 = arith.constant 0 : i32
    %c0_i32_1 = arith.constant 0 : i32
    return %c0_i32, %c0_i32_0 : i32, i32
  }
  func.func @transform_7(%arg0: i32) -> (i32, i32) {
    %c0_i32 = arith.constant 0 : i32
    %c0_i32_0 = arith.constant 0 : i32
    return %arg0, %c0_i32 : i32, i32
  }
}

</mosaic_0001>

<llo_original>
// kernel: tpu_custom_call.1
$region0: #{tpu_custom_call.1}
  #allocation0 [shape = 'u32[]', space=smem, size = 0x4, offset = 0x4, fixed_abs, tag = 'smem constant byte address 0x4 - core index']
  #allocation1 [shape = 'u32[144,128]{1,0:T(1,128)}', space=vmem, size = 0x12000, scoped, tag = 'internal scratch']
  %s0 = inlined_call_operand.vmem [shape: f32[512,16], index: 0, kind: input, shape index: {}]
  %s1 = inlined_call_operand.vmem [shape: bf16[16,160], index: 1, kind: input, shape index: {}]
  %s2 = inlined_call_operand.vmem [shape: f32[1,160], index: 2, kind: input, shape index: {}]
  %s3 = inlined_call_operand.vmem [shape: bf16[160,80], index: 3, kind: input, shape index: {}]
  %s4 = inlined_call_operand.vmem [shape: f32[1,80], index: 4, kind: input, shape index: {}]
  %s5 = inlined_call_operand.vmem [shape: bf16[80,8], index: 5, kind: input, shape index: {}]
  %s6 = inlined_call_operand.vmem [shape: f32[1,8], index: 6, kind: input, shape index: {}]
  %s7 = inlined_call_operand.vmem [shape: f32[512,8], index: 7, kind: output, shape index: {}]
  %s8 = sld [smem:[#allocation0]]
  $region61: #{tpu_custom_call.1} parent=0
    _
  %s10 = ssub.s32 1, %s8
  %s11 = scalar_select 0, %s10, %s8
  loop: start=0, step=1, limit=6
  $region2: #{tpu_custom_call.1} parent=0 // loop_pre_header
    _
  $region3: #{tpu_custom_call.1} parent=0 // loop_header
    %s13 = sphi 0, %s17
    %p14 = scmp.ge.s32.totalorder %s13, 6
    %s23 = sphi 0, %s25
    %s26 = sphi 0, %s23
    %s27 = sphi 0, %s26
    %s43 = sphi 0, %s27
    %s47 = sphi 0, %s47
    %s49 = sphi 0, %s47
    %s50 = sphi 0, %s49
    %s64 = sphi 0, %s50
    %s68 = sphi 0, %s68
    %s70 = sphi 0, %s68
    %s71 = sphi 0, %s70
    %s85 = sphi 0, %s71
    %s89 = sphi 0, %s89
    %s91 = sphi 0, %s89
    %s92 = sphi 0, %s91
    %s106 = sphi 0, %s92
    %s110 = sphi 0, %s110
    %s112 = sphi 0, %s110
    %s113 = sphi 0, %s112
    %s127 = sphi 0, %s113
    %s131 = sphi 0, %s131
    %s133 = sphi 0, %s131
    %s134 = sphi 0, %s133
    %s148 = sphi 0, %s134
    %s152 = sphi 0, %s152
    %s154 = sphi 0, %s152
    %s155 = sphi 0, %s154
    %s169 = sphi 0, %s155
    %s175 = sphi 0, %s177
    %s178 = sphi 0, %s175
    %s179 = sphi 0, %s178
    %s195 = sphi 0, %s179
  $region4: #{tpu_custom_call.1} parent=0 // loop_header_branch
    %16 = sbr.rel (%p14) target = $region8
  $region5: #{tpu_custom_call.1} parent=0 // loop_body
    %s18 = ssub.s32 %s13, 1
    %s19 = ssub.s32 %s13, 2
    %s20 = sadd.s32 %s13, 1
    %s21 = ssub.s32 %s13, %s20
    %p22 = scmp.eq.s32.totalorder %s21, 0
    %s24 = sadd.s32 %s23, 1
    %s25 = scalar_select %p22, %s23, %s24
    %p28 = pneg %p22
    %p29 = scmp.eq.s32.totalorder %s13, 3
    %p30 = por %p28, %p29
    %p31 = scmp.ne.s32.totalorder %s23, %s26
    %p32 = scmp.eq.s32.totalorder %s13, 0
    %p33 = por %p31, %p32
    %p34 = scmp.ne.s32.totalorder %s23, %s26
    %p35 = scmp.eq.s32.totalorder %s18, 3
    %p36 = por %p34, %p35
    %p37 = scmp.ne.s32.totalorder %s26, %s27
    %p38 = scmp.eq.s32.totalorder %s18, 0
    %p39 = por %p37, %p38
    %p40 = scmp.ne.s32.totalorder %s26, %s27
    %p41 = scmp.eq.s32.totalorder %s19, 3
    %p42 = por %p40, %p41
    %p44 = scmp.ne.s32.totalorder %s27, %s43
    %p45 = scmp.eq.s32.totalorder %s19, 0
    %p46 = por %p44, %p45
    %s48 = sadd.s32 %s47, 1
    %p51 = scmp.eq.s32.totalorder %s13, 3
    %p52 = scmp.ne.s32.totalorder %s47, %s49
    %p53 = scmp.eq.s32.totalorder %s13, 0
    %p54 = por %p52, %p53
    %p55 = scmp.ne.s32.totalorder %s47, %s49
    %p56 = scmp.eq.s32.totalorder %s18, 3
    %p57 = por %p55, %p56
    %p58 = scmp.ne.s32.totalorder %s49, %s50
    %p59 = scmp.eq.s32.totalorder %s18, 0
    %p60 = por %p58, %p59
    %p61 = scmp.ne.s32.totalorder %s49, %s50
    %p62 = scmp.eq.s32.totalorder %s19, 3
    %p63 = por %p61, %p62
    %p65 = scmp.ne.s32.totalorder %s50, %s64
    %p66 = scmp.eq.s32.totalorder %s19, 0
    %p67 = por %p65, %p66
    %s69 = sadd.s32 %s68, 1
    %p72 = scmp.eq.s32.totalorder %s13, 3
    %p73 = scmp.ne.s32.totalorder %s68, %s70
    %p74 = scmp.eq.s32.totalorder %s13, 0
    %p75 = por %p73, %p74
    %p76 = scmp.ne.s32.totalorder %s68, %s70
    %p77 = scmp.eq.s32.totalorder %s18, 3
    %p78 = por %p76, %p77
    %p79 = scmp.ne.s32.totalorder %s70, %s71
    %p80 = scmp.eq.s32.totalorder %s18, 0
    %p81 = por %p79, %p80
    %p82 = scmp.ne.s32.totalorder %s70, %s71
    %p83 = scmp.eq.s32.totalorder %s19, 3
    %p84 = por %p82, %p83
    %p86 = scmp.ne.s32.totalorder %s71, %s85
    %p87 = scmp.eq.s32.totalorder %s19, 0
    %p88 = por %p86, %p87
    %s90 = sadd.s32 %s89, 1
    %p93 = scmp.eq.s32.totalorder %s13, 3
    %p94 = scmp.ne.s32.totalorder %s89, %s91
    %p95 = scmp.eq.s32.totalorder %s13, 0
    %p96 = por %p94, %p95
    %p97 = scmp.ne.s32.totalorder %s89, %s91
    %p98 = scmp.eq.s32.totalorder %s18, 3
    %p99 = por %p97, %p98
    %p100 = scmp.ne.s32.totalorder %s91, %s92
    %p101 = scmp.eq.s32.totalorder %s18, 0
    %p102 = por %p100, %p101
    %p103 = scmp.ne.s32.totalorder %s91, %s92
    %p104 = scmp.eq.s32.totalorder %s19, 3
    %p105 = por %p103, %p104
    %p107 = scmp.ne.s32.totalorder %s92, %s106
    %p108 = scmp.eq.s32.totalorder %s19, 0
    %p109 = por %p107, %p108
    %s111 = sadd.s32 %s110, 1
    %p114 = scmp.eq.s32.totalorder %s13, 3
    %p115 = scmp.ne.s32.totalorder %s110, %s112
    %p116 = scmp.eq.s32.totalorder %s13, 0
    %p117 = por %p115, %p116
    %p118 = scmp.ne.s32.totalorder %s110, %s112
    %p119 = scmp.eq.s32.totalorder %s18, 3
    %p120 = por %p118, %p119
    %p121 = scmp.ne.s32.totalorder %s112, %s113
    %p122 = scmp.eq.s32.totalorder %s18, 0
    %p123 = por %p121, %p122
    %p124 = scmp.ne.s32.totalorder %s112, %s113
    %p125 = scmp.eq.s32.totalorder %s19, 3
    %p126 = por %p124, %p125
    %p128 = scmp.ne.s32.totalorder %s113, %s127
    %p129 = scmp.eq.s32.totalorder %s19, 0
    %p130 = por %p128, %p129
    %s132 = sadd.s32 %s131, 1
    %p135 = scmp.eq.s32.totalorder %s13, 3
    %p136 = scmp.ne.s32.totalorder %s131, %s133
    %p137 = scmp.eq.s32.totalorder %s13, 0
    %p138 = por %p136, %p137
    %p139 = scmp.ne.s32.totalorder %s131, %s133
    %p140 = scmp.eq.s32.totalorder %s18, 3
    %p141 = por %p139, %p140
    %p142 = scmp.ne.s32.totalorder %s133, %s134
    %p143 = scmp.eq.s32.totalorder %s18, 0
    %p144 = por %p142, %p143
    %p145 = scmp.ne.s32.totalorder %s133, %s134
    %p146 = scmp.eq.s32.totalorder %s19, 3
    %p147 = por %p145, %p146
    %p149 = scmp.ne.s32.totalorder %s134, %s148
    %p150 = scmp.eq.s32.totalorder %s19, 0
    %p151 = por %p149, %p150
    %s153 = sadd.s32 %s152, 1
    %p156 = scmp.eq.s32.totalorder %s13, 3
    %p157 = scmp.ne.s32.totalorder %s152, %s154
    %p158 = scmp.eq.s32.totalorder %s13, 0
    %p159 = por %p157, %p158
    %p160 = scmp.ne.s32.totalorder %s152, %s154
    %p161 = scmp.eq.s32.totalorder %s18, 3
    %p162 = por %p160, %p161
    %p163 = scmp.ne.s32.totalorder %s154, %s155
    %p164 = scmp.eq.s32.totalorder %s18, 0
    %p165 = por %p163, %p164
    %p166 = scmp.ne.s32.totalorder %s154, %s155
    %p167 = scmp.eq.s32.totalorder %s19, 3
    %p168 = por %p166, %p167
    %p170 = scmp.ne.s32.totalorder %s155, %s169
    %p171 = scmp.eq.s32.totalorder %s19, 0
    %p172 = por %p170, %p171
    %s173 = ssub.s32 %s13, %s20
    %p174 = scmp.eq.s32.totalorder %s173, 0
    %s176 = sadd.s32 %s175, 1
    %s177 = scalar_select %p174, %s175, %s176
    %p180 = pneg %p174
    %p181 = scmp.eq.s32.totalorder %s13, 3
    %p182 = por %p180, %p181
    %p183 = scmp.ne.s32.totalorder %s175, %s178
    %p184 = scmp.eq.s32.totalorder %s13, 0
    %p185 = por %p183, %p184
    %p186 = scmp.ne.s32.totalorder %s175, %s178
    %p187 = scmp.eq.s32.totalorder %s18, 3
    %p188 = por %p186, %p187
    %p189 = scmp.ne.s32.totalorder %s178, %s179
    %p190 = scmp.eq.s32.totalorder %s18, 0
    %p191 = por %p189, %p190
    %p192 = scmp.ne.s32.totalorder %s178, %s179
    %p193 = scmp.eq.s32.totalorder %s19, 3
    %p194 = por %p192, %p193
    %p196 = scmp.ne.s32.totalorder %s179, %s195
    %p197 = scmp.eq.s32.totalorder %s19, 0
    %p198 = por %p196, %p197
    %p199 = scmp.le.s32.totalorder 1, %s13
    %p200 = scmp.lt.s32.totalorder %s13, 5
    %p201 = pnand %p199, %p200
    %p202 = pneg %p201
    // Predicated region
    $region9: #{tpu_custom_call.1} parent=5 // pred_check
      _
    $region10: #{tpu_custom_call.1} parent=5 // pred_check_branch
      %204 = sbr.rel (%p201) target = $region12
    $region11: #{tpu_custom_call.1} parent=5 // pred_region
      %s205 = ssub.s32 %s13, 1
      // Predicated region
      $region13: #{tpu_custom_call.1} parent=11 // pred_check
        %p206 = pneg %p60
      $region14: #{tpu_custom_call.1} parent=11 // pred_check_branch
        %208 = sbr.rel (%p206) target = $region16
      $region15: #{tpu_custom_call.1} parent=11 // pred_region
        _
      $region16: #{tpu_custom_call.1} parent=11 // pred_fallthru
        _
      // Predicated region
      $region17: #{tpu_custom_call.1} parent=11 // pred_check
        %p209 = pneg %p81
      $region18: #{tpu_custom_call.1} parent=11 // pred_check_branch
        %211 = sbr.rel (%p209) target = $region20
      $region19: #{tpu_custom_call.1} parent=11 // pred_region
        _
      $region20: #{tpu_custom_call.1} parent=11 // pred_fallthru
        _
      // Predicated region
      $region21: #{tpu_custom_call.1} parent=11 // pred_check
        %p212 = pneg %p102
      $region22: #{tpu_custom_call.1} parent=11 // pred_check_branch
        %214 = sbr.rel (%p212) target = $region24
      $region23: #{tpu_custom_call.1} parent=11 // pred_region
        _
      $region24: #{tpu_custom_call.1} parent=11 // pred_fallthru
        _
      // Predicated region
      $region25: #{tpu_custom_call.1} parent=11 // pred_check
        %p215 = pneg %p123
      $region26: #{tpu_custom_call.1} parent=11 // pred_check_branch
        %217 = sbr.rel (%p215) target = $region28
      $region27: #{tpu_custom_call.1} parent=11 // pred_region
        _
      $region28: #{tpu_custom_call.1} parent=11 // pred_fallthru
        _
      // Predicated region
      $region29: #{tpu_custom_call.1} parent=11 // pred_check
        %p218 = pneg %p144
      $region30: #{tpu_custom_call.1} parent=11 // pred_check_branch
        %220 = sbr.rel (%p218) target = $region32
      $region31: #{tpu_custom_call.1} parent=11 // pred_region
        _
      $region32: #{tpu_custom_call.1} parent=11 // pred_fallthru
        _
      // Predicated region
      $region33: #{tpu_custom_call.1} parent=11 // pred_check
        %p221 = pneg %p165
      $region34: #{tpu_custom_call.1} parent=11 // pred_check_branch
        %223 = sbr.rel (%p221) target = $region36
      $region35: #{tpu_custom_call.1} parent=11 // pred_region
        _
      $region36: #{tpu_custom_call.1} parent=11 // pred_fallthru
        _
    $region12: #{tpu_custom_call.1} parent=5 // pred_fallthru
      _
    %p224 = scmp.lt.s32.totalorder %s13, 4
    // Predicated region
    $region37: #{tpu_custom_call.1} parent=5 // pred_check
      %p225 = pneg %p224
    $region38: #{tpu_custom_call.1} parent=5 // pred_check_branch
      %227 = sbr.rel (%p225) target = $region40
    $region39: #{tpu_custom_call.1} parent=5 // pred_region
      // Predicated region
      $region41: #{tpu_custom_call.1} parent=39 // pred_check
        %p228 = pneg %p33
      $region42: #{tpu_custom_call.1} parent=39 // pred_check_branch
        %230 = sbr.rel (%p228) target = $region44
      $region43: #{tpu_custom_call.1} parent=39 // pred_region
        %s231 = smul.u32 16, %s13
        %p232 = scmp.lt.s32.totalorder %s231, 63
        %s233 = scalar_select %p232, %s231, 63
        %s234 = smul.addr %s233, 8
        %s235 = scalar_lea.vmem %s0, %s234
        %s236 = smul.u32 16, %s13
      $region44: #{tpu_custom_call.1} parent=39 // pred_fallthru
        _
    $region40: #{tpu_custom_call.1} parent=5 // pred_fallthru
      _
    %p237 = scmp.le.s32.totalorder 1, %s13
    %p238 = scmp.lt.s32.totalorder %s13, 5
    %p239 = pnand %p237, %p238
    %p240 = pneg %p239
    // Predicated region
    $region45: #{tpu_custom_call.1} parent=5 // pred_check
      _
    $region46: #{tpu_custom_call.1} parent=5 // pred_check_branch
      %242 = sbr.rel (%p239) target = $region48
    $region47: #{tpu_custom_call.1} parent=5 // pred_region
      %s243 = ssub.s32 %s13, 1
      %s244 = smul.u32 16, %s18
      %p245 = scmp.lt.s32.totalorder %s244, 63
      %s246 = scalar_select %p245, %s244, 63
      %s247 = smul.addr %s246, 8
      %s248 = scalar_lea.vmem %s0, %s247
      %p249 = pneg %p39
      %p250 = pneg %p36
      %p251 = pneg %p60
      %p252 = pneg %p57
      %p253 = pneg %p81
      %p254 = pneg %p78
      %p255 = pneg %p102
      %p256 = pneg %p99
      %p257 = pneg %p123
      %p258 = pneg %p120
      %p259 = pneg %p144
      %p260 = pneg %p141
      %p261 = pneg %p165
      %p262 = pneg %p162
      %p263 = pneg %p191
      %p264 = pneg %p188
      %s265 = smul.u32 16, %s18
      %p266 = scmp.lt.s32.totalorder %s265, 63
      %s267 = scalar_select %p266, %s265, 63
      %s268 = smul.addr %s267, 8
      %s269 = scalar_lea.vmem %s7, %s268
      %s270 = smul.u32 16, %s18
      %p271 = scmp.lt.s32.totalorder %s270, 63
      %s272 = scalar_select %p271, %s270, 63
      %s273 = smul.addr %s272, 8
      %s274 = scalar_lea.vmem %s0, %s273
      %s275 = smul.u32 16, %s18
      %s276 = smul.u32 16, %s18
      %p277 = scmp.lt.s32.totalorder %s276, 63
      %s278 = scalar_select %p277, %s276, 63
      %s279 = smul.addr %s278, 8
      %s280 = scalar_lea.vmem %s7, %s279
      %s281 = smul.u32 16, %s18
      %v283 = vld [vmem:[%s274] sm:$0xff]
      %v284 = vld [vmem:[%s274 + $0x8] sm:$0xff]
      %v285 = vld [vmem:[%s274 + $0x10] sm:$0xff]
      %v286 = vld [vmem:[%s274 + $0x18] sm:$0xff]
      %v287 = vld [vmem:[%s274 + $0x20] sm:$0xff]
      %v288 = vld [vmem:[%s274 + $0x28] sm:$0xff]
      %v289 = vld [vmem:[%s274 + $0x30] sm:$0xff]
      %v290 = vld [vmem:[%s274 + $0x38] sm:$0xff]
      %v291 = vld [vmem:[%s274 + $0x40] sm:$0xff]
      %v292 = vld [vmem:[%s274 + $0x48] sm:$0xff]
      %v293 = vld [vmem:[%s274 + $0x50] sm:$0xff]
      %v294 = vld [vmem:[%s274 + $0x58] sm:$0xff]
      %v295 = vld [vmem:[%s274 + $0x60] sm:$0xff]
      %v296 = vld [vmem:[%s274 + $0x68] sm:$0xff]
      %v297 = vld [vmem:[%s274 + $0x70] sm:$0xff]
      %v298 = vld [vmem:[%s274 + $0x78] sm:$0xff]
      %v299 = vpack.c.bf16 %v284, %v283
      %v300 = vpack.c.bf16 %v286, %v285
      %v301 = vpack.c.bf16 %v288, %v287
      %v302 = vpack.c.bf16 %v290, %v289
      %v303 = vpack.c.bf16 %v292, %v291
      %v304 = vpack.c.bf16 %v294, %v293
      %v305 = vpack.c.bf16 %v296, %v295
      %v306 = vpack.c.bf16 %v298, %v297
      %v307 = vld [vmem:[%s1] sm:$0xff]
      %v308 = vld [vmem:[%s1 + $0x8] sm:$0xff]
      %v309 = vld [vmem:[%s2] sm:$0x3]
      %v311 = vlaneseq
      %v312 = vshrl.u32 %v311, 7
      %v313 = vsub.s32 0, %v312
      %v314 = vrot.slane %v309, %v313
      %v315 = vlaneseq
      %v316 = vshrl.u32 %v315, 7
      %v317 = vsub.s32 1, %v316
      %v318 = vrot.slane %v309, %v317
      %v323 = vunpack.c.l.b16 %v307
      %v324 = vunpack.c.h.b16 %v307
      %v325 = vunpack.c.l.b16 %v308
      %v326 = vunpack.c.h.b16 %v308
      %v327 = vpack.c.b16 %v325, %v323
      %v328 = vpack.c.b16 %v326, %v324
      %vm331 = vcmask 130048
      %v333 = vsel %vm331, %v299, 0
      %v336 = vsel %vm331, %v300, 0
      %v339 = vsel %vm331, %v301, 0
      %v342 = vsel %vm331, %v302, 0
      %v345 = vsel %vm331, %v303, 0
      %v348 = vsel %vm331, %v304, 0
      %v351 = vsel %vm331, %v305, 0
      %v354 = vsel %vm331, %v306, 0
      %356 = vmatprep.subr.bf16.mxu0 %v328
      %357 = vmatpush1.bf16.msra.mxu0 %v327
      %358 = vmatprep.subr.bf16.mxu0 0
      %359 = vmatpush1.bf16.msra.mxu0 0
      %360 = vmatprep.subr.bf16.mxu0 0
      %361 = vmatpush1.bf16.msra.mxu0 0
      %362 = vmatprep.subr.bf16.mxu0 0
      %363 = vmatpush1.bf16.msra.mxu0 0
      %364 = vmatprep.subr.bf16.mxu0 0
      %365 = vmatpush1.bf16.msra.mxu0 0
      %366 = vmatprep.subr.bf16.mxu0 0
      %367 = vmatpush1.bf16.msra.mxu0 0
      %368 = vmatprep.subr.bf16.mxu0 0
      %369 = vmatpush1.bf16.msra.mxu0 0
      %370 = vmatprep.subr.bf16.mxu0 0
      %371 = vmatpush1.bf16.msra.mxu0 0
      %372 = vmatprep.subr.bf16.mxu0 0
      %373 = vmatpush1.bf16.msra.mxu0 0
      %374 = vmatprep.subr.bf16.mxu0 0
      %375 = vmatpush1.bf16.msra.mxu0 0
      %376 = vmatprep.subr.bf16.mxu0 0
      %377 = vmatpush1.bf16.msra.mxu0 0
      %378 = vmatprep.subr.bf16.mxu0 0
      %379 = vmatpush1.bf16.msra.mxu0 0
      %380 = vmatprep.subr.bf16.mxu0 0
      %381 = vmatpush1.bf16.msra.mxu0 0
      %382 = vmatprep.subr.bf16.mxu0 0
      %383 = vmatpush1.bf16.msra.mxu0 0
      %384 = vmatprep.subr.bf16.mxu0 0
      %385 = vmatpush1.bf16.msra.mxu0 0
      %386 = vmatprep.subr.bf16.mxu0 0
      %387 = vmatpush1.bf16.msra.mxu0 0
      %388 = vmatprep.mubr.bf16.mxu0 0
      %389 = vmatmul.mubr.bf16.gmra.mrb[0].mxu0 %v333
      %v390 = vpop.f32.mrb[0].mxu0
      %v391 = vadd.f32 %v314, %v390
      %v392 = vpop.f32.mrb[0].mxu0
      %v393 = vadd.f32 %v318, %v392
      %v394 = vpop.f32.mrb[0].mxu0
      %v395 = vadd.f32 %v314, %v394
      %v396 = vpop.f32.mrb[0].mxu0
      %v397 = vadd.f32 %v318, %v396
      %398 = vmatprep.mubr.bf16.mxu0 0
      %399 = vmatmul.mubr.bf16.gmra.mrb[0].mxu0 %v336
      %v400 = vpop.f32.mrb[0].mxu0
      %v401 = vadd.f32 %v314, %v400
      %v402 = vpop.f32.mrb[0].mxu0
      %v403 = vadd.f32 %v318, %v402
      %v404 = vpop.f32.mrb[0].mxu0
      %v405 = vadd.f32 %v314, %v404
      %v406 = vpop.f32.mrb[0].mxu0
      %v407 = vadd.f32 %v318, %v406
      %408 = vmatprep.mubr.bf16.mxu0 0
      %409 = vmatmul.mubr.bf16.gmra.mrb[0].mxu0 %v339
      %v410 = vpop.f32.mrb[0].mxu0
      %v411 = vadd.f32 %v314, %v410
      %v412 = vpop.f32.mrb[0].mxu0
      %v413 = vadd.f32 %v318, %v412
      %v414 = vpop.f32.mrb[0].mxu0
      %v415 = vadd.f32 %v314, %v414
      %v416 = vpop.f32.mrb[0].mxu0
      %v417 = vadd.f32 %v318, %v416
      %418 = vmatprep.mubr.bf16.mxu0 0
      %419 = vmatmul.mubr.bf16.gmra.mrb[0].mxu0 %v342
      %v420 = vpop.f32.mrb[0].mxu0
      %v421 = vadd.f32 %v314, %v420
      %v422 = vpop.f32.mrb[0].mxu0
      %v423 = vadd.f32 %v318, %v422
      %v424 = vpop.f32.mrb[0].mxu0
      %v425 = vadd.f32 %v314, %v424
      %v426 = vpop.f32.mrb[0].mxu0
      %v427 = vadd.f32 %v318, %v426
      %428 = vmatprep.mubr.bf16.mxu0 0
      %429 = vmatmul.mubr.bf16.gmra.mrb[0].mxu0 %v345
      %v430 = vpop.f32.mrb[0].mxu0
      %v431 = vadd.f32 %v314, %v430
      %v432 = vpop.f32.mrb[0].mxu0
      %v433 = vadd.f32 %v318, %v432
      %v434 = vpop.f32.mrb[0].mxu0
      %v435 = vadd.f32 %v314, %v434
      %v436 = vpop.f32.mrb[0].mxu0
      %v437 = vadd.f32 %v318, %v436
      %438 = vmatprep.mubr.bf16.mxu0 0
      %439 = vmatmul.mubr.bf16.gmra.mrb[0].mxu0 %v348
      %v440 = vpop.f32.mrb[0].mxu0
      %v441 = vadd.f32 %v314, %v440
      %v442 = vpop.f32.mrb[0].mxu0
      %v443 = vadd.f32 %v318, %v442
      %v444 = vpop.f32.mrb[0].mxu0
      %v445 = vadd.f32 %v314, %v444
      %v446 = vpop.f32.mrb[0].mxu0
      %v447 = vadd.f32 %v318, %v446
      %448 = vmatprep.mubr.bf16.mxu0 0
      %449 = vmatmul.mubr.bf16.gmra.mrb[0].mxu0 %v351
      %v450 = vpop.f32.mrb[0].mxu0
      %v451 = vadd.f32 %v314, %v450
      %v452 = vpop.f32.mrb[0].mxu0
      %v453 = vadd.f32 %v318, %v452
      %v454 = vpop.f32.mrb[0].mxu0
      %v455 = vadd.f32 %v314, %v454
      %v456 = vpop.f32.mrb[0].mxu0
      %v457 = vadd.f32 %v318, %v456
      %458 = vmatprep.mubr.bf16.mxu0 0
      %459 = vmatmul.mubr.bf16.gmra.mrb[0].mxu0 %v354
      %v460 = vpop.f32.mrb[0].mxu0
      %v461 = vadd.f32 %v314, %v460
      %v462 = vpop.f32.mrb[0].mxu0
      %v463 = vadd.f32 %v318, %v462
      %v464 = vpop.f32.mrb[0].mxu0
      %v465 = vadd.f32 %v314, %v464
      %v466 = vpop.f32.mrb[0].mxu0
      %v467 = vadd.f32 %v318, %v466
      %468 = vdwg.mxu0
      %v469 = vmax.f32 %v391, 0.0
      %v470 = vmax.f32 %v393, 0.0
      %v471 = vmax.f32 %v395, 0.0
      %v472 = vmax.f32 %v397, 0.0
      %v473 = vmax.f32 %v401, 0.0
      %v474 = vmax.f32 %v403, 0.0
      %v475 = vmax.f32 %v405, 0.0
      %v476 = vmax.f32 %v407, 0.0
      %v477 = vmax.f32 %v411, 0.0
      %v478 = vmax.f32 %v413, 0.0
      %v479 = vmax.f32 %v415, 0.0
      %v480 = vmax.f32 %v417, 0.0
      %v481 = vmax.f32 %v421, 0.0
      %v482 = vmax.f32 %v423, 0.0
      %v483 = vmax.f32 %v425, 0.0
      %v484 = vmax.f32 %v427, 0.0
      %v485 = vmax.f32 %v431, 0.0
      %v486 = vmax.f32 %v433, 0.0
      %v487 = vmax.f32 %v435, 0.0
      %v488 = vmax.f32 %v437, 0.0
      %v489 = vmax.f32 %v441, 0.0
      %v490 = vmax.f32 %v443, 0.0
      %v491 = vmax.f32 %v445, 0.0
      %v492 = vmax.f32 %v447, 0.0
      %v493 = vmax.f32 %v451, 0.0
      %v494 = vmax.f32 %v453, 0.0
      %v495 = vmax.f32 %v455, 0.0
      %v496 = vmax.f32 %v457, 0.0
      %v497 = vmax.f32 %v461, 0.0
      %v498 = vmax.f32 %v463, 0.0
      %v499 = vmax.f32 %v465, 0.0
      %v500 = vmax.f32 %v467, 0.0
      %v501 = vpack.c.bf16 %v471, %v469
      %v502 = vpack.c.bf16 %v472, %v470
      %v503 = vpack.c.bf16 %v475, %v473
      %v504 = vpack.c.bf16 %v476, %v474
      %v505 = vpack.c.bf16 %v479, %v477
      %v506 = vpack.c.bf16 %v480, %v478
      %v507 = vpack.c.bf16 %v483, %v481
      %v508 = vpack.c.bf16 %v484, %v482
      %v509 = vpack.c.bf16 %v487, %v485
      %v510 = vpack.c.bf16 %v488, %v486
      %v511 = vpack.c.bf16 %v491, %v489
      %v512 = vpack.c.bf16 %v492, %v490
      %v513 = vpack.c.bf16 %v495, %v493
      %v514 = vpack.c.bf16 %v496, %v494
      %v515 = vpack.c.bf16 %v499, %v497
      %v516 = vpack.c.bf16 %v500, %v498
      %v517 = vld [vmem:[%s3] sm:$0xf]
      %v518 = vld [vmem:[%s3 + $0x4] sm:$0xf]
      %v519 = vld [vmem:[%s3 + $0x8] sm:$0xf]
      %v520 = vld [vmem:[%s3 + $0xc] sm:$0xf]
      %v521 = vld [vmem:[%s3 + $0x10] sm:$0xf]
      %v522 = vld [vmem:[%s3 + $0x14] sm:$0xf]
      %v523 = vld [vmem:[%s3 + $0x18] sm:$0xf]
      %v524 = vld [vmem:[%s3 + $0x1c] sm:$0xf]
      %v525 = vld [vmem:[%s3 + $0x20] sm:$0xf]
      %v526 = vld [vmem:[%s3 + $0x24] sm:$0xf]
      %v527 = vld [vmem:[%s3 + $0x28] sm:$0xf]
      %v528 = vld [vmem:[%s3 + $0x2c] sm:$0xf]
      %v529 = vld [vmem:[%s3 + $0x30] sm:$0xf]
      %v530 = vld [vmem:[%s3 + $0x34] sm:$0xf]
      %v531 = vld [vmem:[%s3 + $0x38] sm:$0xf]
      %v532 = vld [vmem:[%s3 + $0x3c] sm:$0xf]
      %v533 = vld [vmem:[%s3 + $0x40] sm:$0xf]
      %v534 = vld [vmem:[%s3 + $0x44] sm:$0xf]
      %v535 = vld [vmem:[%s3 + $0x48] sm:$0xf]
      %v536 = vld [vmem:[%s3 + $0x4c] sm:$0xf]
      %v537 = vld [vmem:[%s4] sm:$0x1]
      %v539 = vlaneseq
      %v540 = vshrl.u32 %v539, 7
      %v541 = vsub.s32 0, %v540
      %v542 = vrot.slane %v537, %v541
      %v564 = vunpack.c.l.b16 %v517
      %v565 = vunpack.c.l.b16 %v518
      %v566 = vunpack.c.l.b16 %v519
      %v567 = vunpack.c.l.b16 %v520
      %v568 = vunpack.c.l.b16 %v521
      %v569 = vunpack.c.l.b16 %v522
      %v570 = vunpack.c.l.b16 %v523
      %v571 = vunpack.c.l.b16 %v524
      %v572 = vunpack.c.l.b16 %v525
      %v573 = vunpack.c.l.b16 %v526
      %v574 = vunpack.c.l.b16 %v527
      %v575 = vunpack.c.l.b16 %v528
      %v576 = vunpack.c.l.b16 %v529
      %v577 = vunpack.c.l.b16 %v530
      %v578 = vunpack.c.l.b16 %v531
      %v579 = vunpack.c.l.b16 %v532
      %v580 = vunpack.c.l.b16 %v533
      %v581 = vunpack.c.l.b16 %v534
      %v582 = vunpack.c.l.b16 %v535
      %v583 = vunpack.c.l.b16 %v536
      %v584 = vpack.c.b16 %v565, %v564
      %v585 = vpack.c.b16 %v567, %v566
      %v586 = vpack.c.b16 %v569, %v568
      %v587 = vpack.c.b16 %v571, %v570
      %v588 = vpack.c.b16 %v573, %v572
      %v589 = vpack.c.b16 %v575, %v574
      %v590 = vpack.c.b16 %v577, %v576
      %v591 = vpack.c.b16 %v579, %v578
      %v592 = vpack.c.b16 %v581, %v580
      %v593 = vpack.c.b16 %v583, %v582
      %vm604 = vcmask 261120
      %v606 = vsel %vm604, %v502, 0
      %v609 = vsel %vm604, %v504, 0
      %v612 = vsel %vm604, %v506, 0
      %v615 = vsel %vm604, %v508, 0
      %v618 = vsel %vm604, %v510, 0
      %v621 = vsel %vm604, %v512, 0
      %v624 = vsel %vm604, %v514, 0
      %v627 = vsel %vm604, %v516, 0
      %629 = vmatprep.subr.bf16.mxu0 0
      %630 = vmatpush1.bf16.msra.mxu0 %v584
      %631 = vmatprep.subr.bf16.mxu0 0
      %632 = vmatpush1.bf16.msra.mxu0 %v585
      %633 = vmatprep.subr.bf16.mxu0 0
      %634 = vmatpush1.bf16.msra.mxu0 %v586
      %635 = vmatprep.subr.bf16.mxu0 0
      %636 = vmatpush1.bf16.msra.mxu0 %v587
      %637 = vmatprep.subr.bf16.mxu0 0
      %638 = vmatpush1.bf16.msra.mxu0 %v588
      %639 = vmatprep.subr.bf16.mxu0 0
      %640 = vmatpush1.bf16.msra.mxu0 %v589
      %641 = vmatprep.subr.bf16.mxu0 0
      %642 = vmatpush1.bf16.msra.mxu0 %v590
      %643 = vmatprep.subr.bf16.mxu0 0
      %644 = vmatpush1.bf16.msra.mxu0 %v591
      %645 = vmatprep.subr.bf16.mxu0 0
      %646 = vmatpush1.bf16.msra.mxu0 %v592
      %647 = vmatprep.subr.bf16.mxu0 0
      %648 = vmatpush1.bf16.msra.mxu0 %v593
      %649 = vmatprep.subr.bf16.mxu0 0
      %650 = vmatpush1.bf16.msra.mxu0 0
      %651 = vmatprep.subr.bf16.mxu0 0
      %652 = vmatpush1.bf16.msra.mxu0 0
      %653 = vmatprep.subr.bf16.mxu0 0
      %654 = vmatpush1.bf16.msra.mxu0 0
      %655 = vmatprep.subr.bf16.mxu0 0
      %656 = vmatpush1.bf16.msra.mxu0 0
      %657 = vmatprep.subr.bf16.mxu0 0
      %658 = vmatpush1.bf16.msra.mxu0 0
      %659 = vmatprep.subr.bf16.mxu0 0
      %660 = vmatpush1.bf16.msra.mxu0 0
      %661 = vmatprep.mubr.bf16.mxu0 %v606
      %662 = vmatmul.mubr.bf16.gmra.mrb[0].mxu0 %v501
      %v663 = vpop.f32.mrb[0].mxu0
      %v664 = vadd.f32 %v542, %v663
      %v665 = vpop.f32.mrb[0].mxu0
      %v666 = vpop.f32.mrb[0].mxu0
      %v667 = vadd.f32 %v542, %v666
      %v668 = vpop.f32.mrb[0].mxu0
      %669 = vmatprep.mubr.bf16.mxu0 %v609
      %670 = vmatmul.mubr.bf16.gmra.mrb[0].mxu0 %v503
      %v671 = vpop.f32.mrb[0].mxu0
      %v672 = vadd.f32 %v542, %v671
      %v673 = vpop.f32.mrb[0].mxu0
      %v674 = vpop.f32.mrb[0].mxu0
      %v675 = vadd.f32 %v542, %v674
      %v676 = vpop.f32.mrb[0].mxu0
      %677 = vmatprep.mubr.bf16.mxu0 %v612
      %678 = vmatmul.mubr.bf16.gmra.mrb[0].mxu0 %v505
      %v679 = vpop.f32.mrb[0].mxu0
      %v680 = vadd.f32 %v542, %v679
      %v681 = vpop.f32.mrb[0].mxu0
      %v682 = vpop.f32.mrb[0].mxu0
      %v683 = vadd.f32 %v542, %v682
      %v684 = vpop.f32.mrb[0].mxu0
      %685 = vmatprep.mubr.bf16.mxu0 %v615
      %686 = vmatmul.mubr.bf16.gmra.mrb[0].mxu0 %v507
      %v687 = vpop.f32.mrb[0].mxu0
      %v688 = vadd.f32 %v542, %v687
      %v689 = vpop.f32.mrb[0].mxu0
      %v690 = vpop.f32.mrb[0].mxu0
      %v691 = vadd.f32 %v542, %v690
      %v692 = vpop.f32.mrb[0].mxu0
      %693 = vmatprep.mubr.bf16.mxu0 %v618
      %694 = vmatmul.mubr.bf16.gmra.mrb[0].mxu0 %v509
      %v695 = vpop.f32.mrb[0].mxu0
      %v696 = vadd.f32 %v542, %v695
      %v697 = vpop.f32.mrb[0].mxu0
      %v698 = vpop.f32.mrb[0].mxu0
      %v699 = vadd.f32 %v542, %v698
      %v700 = vpop.f32.mrb[0].mxu0
      %701 = vmatprep.mubr.bf16.mxu0 %v621
      %702 = vmatmul.mubr.bf16.gmra.mrb[0].mxu0 %v511
      %v703 = vpop.f32.mrb[0].mxu0
      %v704 = vadd.f32 %v542, %v703
      %v705 = vpop.f32.mrb[0].mxu0
      %v706 = vpop.f32.mrb[0].mxu0
      %v707 = vadd.f32 %v542, %v706
      %v708 = vpop.f32.mrb[0].mxu0
      %709 = vmatprep.mubr.bf16.mxu0 %v624
      %710 = vmatmul.mubr.bf16.gmra.mrb[0].mxu0 %v513
      %v711 = vpop.f32.mrb[0].mxu0
      %v712 = vadd.f32 %v542, %v711
      %v713 = vpop.f32.mrb[0].mxu0
      %v714 = vpop.f32.mrb[0].mxu0
      %v715 = vadd.f32 %v542, %v714
      %v716 = vpop.f32.mrb[0].mxu0
      %717 = vmatprep.mubr.bf16.mxu0 %v627
      %718 = vmatmul.mubr.bf16.gmra.mrb[0].mxu0 %v515
      %v719 = vpop.f32.mrb[0].mxu0
      %v720 = vadd.f32 %v542, %v719
      %v721 = vpop.f32.mrb[0].mxu0
      %v722 = vpop.f32.mrb[0].mxu0
      %v723 = vadd.f32 %v542, %v722
      %v724 = vpop.f32.mrb[0].mxu0
      %725 = vdwg.mxu0
      %v726 = vmax.f32 %v664, 0.0
      %v727 = vmax.f32 %v667, 0.0
      %v728 = vmax.f32 %v672, 0.0
      %v729 = vmax.f32 %v675, 0.0
      %v730 = vmax.f32 %v680, 0.0
      %v731 = vmax.f32 %v683, 0.0
      %v732 = vmax.f32 %v688, 0.0
      %v733 = vmax.f32 %v691, 0.0
      %v734 = vmax.f32 %v696, 0.0
      %v735 = vmax.f32 %v699, 0.0
      %v736 = vmax.f32 %v704, 0.0
      %v737 = vmax.f32 %v707, 0.0
      %v738 = vmax.f32 %v712, 0.0
      %v739 = vmax.f32 %v715, 0.0
      %v740 = vmax.f32 %v720, 0.0
      %v741 = vmax.f32 %v723, 0.0
      %v742 = vpack.c.bf16 %v727, %v726
      %v743 = vpack.c.bf16 %v729, %v728
      %v744 = vpack.c.bf16 %v731, %v730
      %v745 = vpack.c.bf16 %v733, %v732
      %v746 = vpack.c.bf16 %v735, %v734
      %v747 = vpack.c.bf16 %v737, %v736
      %v748 = vpack.c.bf16 %v739, %v738
      %v749 = vpack.c.bf16 %v741, %v740
      %v750 = vld [vmem:[%s5] sm:$0xf]
      %v751 = vld [vmem:[%s5 + $0x4] sm:$0xf]
      %v752 = vld [vmem:[%s5 + $0x8] sm:$0xf]
      %v753 = vld [vmem:[%s5 + $0xc] sm:$0xf]
      %v754 = vld [vmem:[%s5 + $0x10] sm:$0xf]
      %v755 = vld [vmem:[%s5 + $0x14] sm:$0xf]
      %v756 = vld [vmem:[%s5 + $0x18] sm:$0xf]
      %v757 = vld [vmem:[%s5 + $0x1c] sm:$0xf]
      %v758 = vld [vmem:[%s5 + $0x20] sm:$0xf]
      %v759 = vld [vmem:[%s5 + $0x24] sm:$0xf]
      %v760 = vld [vmem:[%s6] sm:$0x1]
      %v762 = vlaneseq
      %v763 = vshrl.u32 %v762, 7
      %v764 = vsub.s32 0, %v763
      %v765 = vrot.slane %v760, %v764
      %v777 = vunpack.c.l.b16 %v750
      %v778 = vunpack.c.l.b16 %v751
      %v779 = vunpack.c.l.b16 %v752
      %v780 = vunpack.c.l.b16 %v753
      %v781 = vunpack.c.l.b16 %v754
      %v782 = vunpack.c.l.b16 %v755
      %v783 = vunpack.c.l.b16 %v756
      %v784 = vunpack.c.l.b16 %v757
      %v785 = vunpack.c.l.b16 %v758
      %v786 = vunpack.c.l.b16 %v759
      %v787 = vpack.c.b16 %v778, %v777
      %v788 = vpack.c.b16 %v780, %v779
      %v789 = vpack.c.b16 %v782, %v781
      %v790 = vpack.c.b16 %v784, %v783
      %v791 = vpack.c.b16 %v786, %v785
      %vm797 = vcmask 654336
      %v799 = vsel %vm797, %v742, 0
      %v802 = vsel %vm797, %v743, 0
      %v805 = vsel %vm797, %v744, 0
      %v808 = vsel %vm797, %v745, 0
      %v811 = vsel %vm797, %v746, 0
      %v814 = vsel %vm797, %v747, 0
      %v817 = vsel %vm797, %v748, 0
      %v820 = vsel %vm797, %v749, 0
      %822 = vmatprep.subr.bf16.mxu0 0
      %823 = vmatpush1.bf16.msra.mxu0 %v787
      %824 = vmatprep.subr.bf16.mxu0 0
      %825 = vmatpush1.bf16.msra.mxu0 %v788
      %826 = vmatprep.subr.bf16.mxu0 0
      %827 = vmatpush1.bf16.msra.mxu0 %v789
      %828 = vmatprep.subr.bf16.mxu0 0
      %829 = vmatpush1.bf16.msra.mxu0 %v790
      %830 = vmatprep.subr.bf16.mxu0 0
      %831 = vmatpush1.bf16.msra.mxu0 %v791
      %832 = vmatprep.subr.bf16.mxu0 0
      %833 = vmatpush1.bf16.msra.mxu0 0
      %834 = vmatprep.subr.bf16.mxu0 0
      %835 = vmatpush1.bf16.msra.mxu0 0
      %836 = vmatprep.subr.bf16.mxu0 0
      %837 = vmatpush1.bf16.msra.mxu0 0
      %838 = vmatprep.subr.bf16.mxu0 0
      %839 = vmatpush1.bf16.msra.mxu0 0
      %840 = vmatprep.subr.bf16.mxu0 0
      %841 = vmatpush1.bf16.msra.mxu0 0
      %842 = vmatprep.subr.bf16.mxu0 0
      %843 = vmatpush1.bf16.msra.mxu0 0
      %844 = vmatprep.subr.bf16.mxu0 0
      %845 = vmatpush1.bf16.msra.mxu0 0
      %846 = vmatprep.subr.bf16.mxu0 0
      %847 = vmatpush1.bf16.msra.mxu0 0
      %848 = vmatprep.subr.bf16.mxu0 0
      %849 = vmatpush1.bf16.msra.mxu0 0
      %850 = vmatprep.subr.bf16.mxu0 0
      %851 = vmatpush1.bf16.msra.mxu0 0
      %852 = vmatprep.subr.bf16.mxu0 0
      %853 = vmatpush1.bf16.msra.mxu0 0
      %854 = vmatprep.mubr.bf16.mxu0 0
      %855 = vmatmul.mubr.bf16.gmra.mrb[0].mxu0 %v799
      %v856 = vpop.f32.mrb[0].mxu0
      %v857 = vadd.f32 %v765, %v856
      %v858 = vpop.f32.mrb[0].mxu0
      %v859 = vpop.f32.mrb[0].mxu0
      %v860 = vadd.f32 %v765, %v859
      %v861 = vpop.f32.mrb[0].mxu0
      %862 = vmatprep.mubr.bf16.mxu0 0
      %863 = vmatmul.mubr.bf16.gmra.mrb[0].mxu0 %v802
      %v864 = vpop.f32.mrb[0].mxu0
      %v865 = vadd.f32 %v765, %v864
      %v866 = vpop.f32.mrb[0].mxu0
      %v867 = vpop.f32.mrb[0].mxu0
      %v868 = vadd.f32 %v765, %v867
      %v869 = vpop.f32.mrb[0].mxu0
      %870 = vmatprep.mubr.bf16.mxu0 0
      %871 = vmatmul.mubr.bf16.gmra.mrb[0].mxu0 %v805
      %v872 = vpop.f32.mrb[0].mxu0
      %v873 = vadd.f32 %v765, %v872
      %v874 = vpop.f32.mrb[0].mxu0
      %v875 = vpop.f32.mrb[0].mxu0
      %v876 = vadd.f32 %v765, %v875
      %v877 = vpop.f32.mrb[0].mxu0
      %878 = vmatprep.mubr.bf16.mxu0 0
      %879 = vmatmul.mubr.bf16.gmra.mrb[0].mxu0 %v808
      %v880 = vpop.f32.mrb[0].mxu0
      %v881 = vadd.f32 %v765, %v880
      %v882 = vpop.f32.mrb[0].mxu0
      %v883 = vpop.f32.mrb[0].mxu0
      %v884 = vadd.f32 %v765, %v883
      %v885 = vpop.f32.mrb[0].mxu0
      %886 = vmatprep.mubr.bf16.mxu0 0
      %887 = vmatmul.mubr.bf16.gmra.mrb[0].mxu0 %v811
      %v888 = vpop.f32.mrb[0].mxu0
      %v889 = vadd.f32 %v765, %v888
      %v890 = vpop.f32.mrb[0].mxu0
      %v891 = vpop.f32.mrb[0].mxu0
      %v892 = vadd.f32 %v765, %v891
      %v893 = vpop.f32.mrb[0].mxu0
      %894 = vmatprep.mubr.bf16.mxu0 0
      %895 = vmatmul.mubr.bf16.gmra.mrb[0].mxu0 %v814
      %v896 = vpop.f32.mrb[0].mxu0
      %v897 = vadd.f32 %v765, %v896
      %v898 = vpop.f32.mrb[0].mxu0
      %v899 = vpop.f32.mrb[0].mxu0
      %v900 = vadd.f32 %v765, %v899
      %v901 = vpop.f32.mrb[0].mxu0
      %902 = vmatprep.mubr.bf16.mxu0 0
      %903 = vmatmul.mubr.bf16.gmra.mrb[0].mxu0 %v817
      %v904 = vpop.f32.mrb[0].mxu0
      %v905 = vadd.f32 %v765, %v904
      %v906 = vpop.f32.mrb[0].mxu0
      %v907 = vpop.f32.mrb[0].mxu0
      %v908 = vadd.f32 %v765, %v907
      %v909 = vpop.f32.mrb[0].mxu0
      %910 = vmatprep.mubr.bf16.mxu0 0
      %911 = vmatmul.mubr.bf16.gmra.mrb[0].mxu0 %v820
      %v912 = vpop.f32.mrb[0].mxu0
      %v913 = vadd.f32 %v765, %v912
      %v914 = vpop.f32.mrb[0].mxu0
      %v915 = vpop.f32.mrb[0].mxu0
      %v916 = vadd.f32 %v765, %v915
      %v917 = vpop.f32.mrb[0].mxu0
      %918 = vdwg.mxu0
      %v919 = vmul.f32 %v857, 0.5
      %v920 = vmul.f32 %v860, 0.5
      %v921 = vmul.f32 %v865, 0.5
      %v922 = vmul.f32 %v868, 0.5
      %v923 = vmul.f32 %v873, 0.5
      %v924 = vmul.f32 %v876, 0.5
      %v925 = vmul.f32 %v881, 0.5
      %v926 = vmul.f32 %v884, 0.5
      %v927 = vmul.f32 %v889, 0.5
      %v928 = vmul.f32 %v892, 0.5
      %v929 = vmul.f32 %v897, 0.5
      %v930 = vmul.f32 %v900, 0.5
      %v931 = vmul.f32 %v905, 0.5
      %v932 = vmul.f32 %v908, 0.5
      %v933 = vmul.f32 %v913, 0.5
      %v934 = vmul.f32 %v916, 0.5
      %v935 = vtanh.pop %v919
      %v936 = vtanh.pop %v920
      %v937 = vtanh.pop %v921
      %v938 = vtanh.pop %v922
      %v939 = vtanh.pop %v923
      %v940 = vtanh.pop %v924
      %v941 = vtanh.pop %v925
      %v942 = vtanh.pop %v926
      %v943 = vtanh.pop %v927
      %v944 = vtanh.pop %v928
      %v945 = vtanh.pop %v929
      %v946 = vtanh.pop %v930
      %v947 = vtanh.pop %v931
      %v948 = vtanh.pop %v932
      %v949 = vtanh.pop %v933
      %v950 = vtanh.pop %v934
      %v951 = vmul.f32 %v935, 2.0
      %v952 = vmul.f32 %v936, 2.0
      %v953 = vmul.f32 %v937, 2.0
      %v954 = vmul.f32 %v938, 2.0
      %v955 = vmul.f32 %v939, 2.0
      %v956 = vmul.f32 %v940, 2.0
      %v957 = vmul.f32 %v941, 2.0
      %v958 = vmul.f32 %v942, 2.0
      %v959 = vmul.f32 %v943, 2.0
      %v960 = vmul.f32 %v944, 2.0
      %v961 = vmul.f32 %v945, 2.0
      %v962 = vmul.f32 %v946, 2.0
      %v963 = vmul.f32 %v947, 2.0
      %v964 = vmul.f32 %v948, 2.0
      %v965 = vmul.f32 %v949, 2.0
      %v966 = vmul.f32 %v950, 2.0
      %vm967 = vcmask 64512
      %968 = vst.msk [vmem:[%s280] sm:$0xff] %vm967, %v951
      %969 = vst.msk [vmem:[%s280 + $0x8] sm:$0xff] %vm967, %v952
      %970 = vst.msk [vmem:[%s280 + $0x10] sm:$0xff] %vm967, %v953
      %971 = vst.msk [vmem:[%s280 + $0x18] sm:$0xff] %vm967, %v954
      %972 = vst.msk [vmem:[%s280 + $0x20] sm:$0xff] %vm967, %v955
      %973 = vst.msk [vmem:[%s280 + $0x28] sm:$0xff] %vm967, %v956
      %974 = vst.msk [vmem:[%s280 + $0x30] sm:$0xff] %vm967, %v957
      %975 = vst.msk [vmem:[%s280 + $0x38] sm:$0xff] %vm967, %v958
      %976 = vst.msk [vmem:[%s280 + $0x40] sm:$0xff] %vm967, %v959
      %977 = vst.msk [vmem:[%s280 + $0x48] sm:$0xff] %vm967, %v960
      %978 = vst.msk [vmem:[%s280 + $0x50] sm:$0xff] %vm967, %v961
      %979 = vst.msk [vmem:[%s280 + $0x58] sm:$0xff] %vm967, %v962
      %980 = vst.msk [vmem:[%s280 + $0x60] sm:$0xff] %vm967, %v963
      %981 = vst.msk [vmem:[%s280 + $0x68] sm:$0xff] %vm967, %v964
      %982 = vst.msk [vmem:[%s280 + $0x70] sm:$0xff] %vm967, %v965
      %983 = vst.msk [vmem:[%s280 + $0x78] sm:$0xff] %vm967, %v966
      %s984 = smul.u32 16, %s18
      %p985 = scmp.lt.s32.totalorder %s984, 63
      %s986 = scalar_select %p985, %s984, 63
      %s987 = smul.addr %s986, 8
      %s988 = scalar_lea.vmem %s7, %s987
      // Predicated region
      $region49: #{tpu_custom_call.1} parent=47 // pred_check
        %p989 = pneg %p188
      $region50: #{tpu_custom_call.1} parent=47 // pred_check_branch
        %991 = sbr.rel (%p989) target = $region52
      $region51: #{tpu_custom_call.1} parent=47 // pred_region
        %s992 = smul.u32 16, %s18
      $region52: #{tpu_custom_call.1} parent=47 // pred_fallthru
        _
    $region48: #{tpu_custom_call.1} parent=5 // pred_fallthru
      _
    %p993 = scmp.le.s32.totalorder 2, %s13
    // Predicated region
    $region53: #{tpu_custom_call.1} parent=5 // pred_check
      %p994 = pneg %p993
    $region54: #{tpu_custom_call.1} parent=5 // pred_check_branch
      %996 = sbr.rel (%p994) target = $region56
    $region55: #{tpu_custom_call.1} parent=5 // pred_region
      %s997 = ssub.s32 %s13, 2
      // Predicated region
      $region57: #{tpu_custom_call.1} parent=55 // pred_check
        %p998 = pneg %p194
      $region58: #{tpu_custom_call.1} parent=55 // pred_check_branch
        %1000 = sbr.rel (%p998) target = $region60
      $region59: #{tpu_custom_call.1} parent=55 // pred_region
        %s1001 = smul.u32 16, %s19
        %p1002 = scmp.lt.s32.totalorder %s1001, 63
        %s1003 = scalar_select %p1002, %s1001, 63
        %s1004 = smul.addr %s1003, 8
        %s1005 = scalar_lea.vmem %s7, %s1004
      $region60: #{tpu_custom_call.1} parent=55 // pred_fallthru
        _
    $region56: #{tpu_custom_call.1} parent=5 // pred_fallthru
      _
  $region6: #{tpu_custom_call.1} parent=0 // loop_footer
    %s17 = sadd.s32 1, %s13
  $region7: #{tpu_custom_call.1} parent=0 // loop_footer_branch
    %12 = sbr.rel target = $region3
  $region8: #{tpu_custom_call.1} parent=0 // loop_exit
    _

</llo_original>
